<compile_context>
chip_gen: v7x
topology: tpu7x:2x2x1
jax: 0.10.0
libtpu: 0.0.40
codegen_flags: <defaults>
</compile_context>

<pallas_src>
import jax
import jax.numpy as jnp
from jax import lax
from jax.experimental import pallas as pl
from jax.experimental.pallas import tpu as pltpu

_O_PAD = 8  # sublane-aligned padded output-row count (n_classes - 1 is tiny)


def _head_kernel(x_ref, w_ref, b_ref, o_ref):
    # x_ref: (TB, K)      batch tile of x reshaped to (B, C*D)
    # w_ref: (O_PAD, K)   weight pre-scaled by 1/C, replicated over channels, zero-pad rows
    # b_ref: (O_PAD, 1)   zero-padded bias (f32)
    # o_ref: (O_PAD, TB)  output tile: batch in the lane dim (dense vst)
    # TODO(synk): dropout is identity at inference; training-mode dropout not modeled.
    y = lax.dot_general(
        w_ref[...], x_ref[...],
        dimension_numbers=(((1,), (1,)), ((), ())),
        preferred_element_type=jnp.float32)
    o_ref[...] = (y + b_ref[...]).astype(o_ref.dtype)


def _vmem_budget_bytes():
    """Generation-aware data-buffer budget (v5e/v6e: 128 MiB physical, v7x: 64 MiB)."""
    try:
        cap = int(pltpu.get_tpu_info().vmem_capacity_bytes)
    except Exception:
        cap = 64 << 20                       # conservative (v7x) fallback
    return int(min(24 << 20, cap // 4))


def _pick_batch_tile(B, K, itemsize, budget):
    """Batch-tile rows: lane-multiple, VMEM-budgeted, >= ~4 grid steps when possible."""
    if B <= 128:
        return B                             # single full-batch tile (block == full dims)
    fixed = 2 * _O_PAD * (K * itemsize + 4)          # resident double-buffered weight + bias
    per_row = 2 * K * itemsize + 2 * _O_PAD * 4      # double-buffered x row + out column
    avail = max(budget - fixed, 2 << 20)
    tb = (avail // per_row) // 128 * 128
    quarter = -(-B // 4)                             # ceil(B / 4): >= 2 tiles per v7x core
    quarter = -(-quarter // 128) * 128               # rounded up to a lane multiple
    return int(max(128, min(tb, quarter, 1024)))


def prepare_head_params(weight, bias, n_channels, compute_dtype=jnp.float32):
    """One-time parameter prep (hoisted out of the per-call forward).

    weight: (O, D) in PyTorch nn.Linear layout; bias: (O,).
    Returns (w_pad, b_pad): weight scaled by 1/C and replicated C times along the
    contraction dim (so the MXU performs the channel mean), zero-padded to _O_PAD
    rows; bias zero-padded to (_O_PAD, 1) f32.
    """
    O, D = weight.shape
    assert O <= _O_PAD, f"n_classes-1={O} > {_O_PAD}; raise _O_PAD (multiple of 8)."
    w_scaled = weight.astype(jnp.float32) * (1.0 / n_channels)
    w_rep = jnp.tile(w_scaled, (1, n_channels)).astype(compute_dtype)      # (O, C*D)
    w_pad = jnp.zeros((_O_PAD, n_channels * D), compute_dtype).at[:O].set(w_rep)
    b_pad = jnp.zeros((_O_PAD, 1), jnp.float32).at[:O, 0].set(bias.astype(jnp.float32))
    return w_pad, b_pad


def classification_head(x, w_pad, b_pad, n_out):
    """x: (B, C, D) f32/bf16; (w_pad, b_pad) from prepare_head_params -> (B, n_out) f32."""
    B, C, D = x.shape
    K = C * D
    x2d = x.reshape(B, K)                    # free row-major reshape; channel mean folds into K

    itemsize = x2d.dtype.itemsize
    TB = _pick_batch_tile(B, K, itemsize, _vmem_budget_bytes())
    grid = (pl.cdiv(B, TB),)                 # ragged last block handled by Pallas; no pad copy

    working = (2 * TB * K * itemsize                    # double-buffered x tiles
               + 2 * _O_PAD * (K * w_pad.dtype.itemsize + 4)  # resident weight + bias
               + 2 * _O_PAD * TB * 4)                   # double-buffered output tiles
    vmem_limit = int(max(32 << 20, working + (4 << 20)))

    cost = pl.CostEstimate(
        flops=2 * B * K * _O_PAD,
        transcendentals=0,
        bytes_accessed=B * K * itemsize + _O_PAD * K * w_pad.dtype.itemsize
        + _O_PAD * 4 + _O_PAD * B * 4,
    )

    out = pl.pallas_call(
        _head_kernel,
        out_shape=jax.ShapeDtypeStruct((_O_PAD, B), jnp.float32),
        grid=grid,
        in_specs=[
            pl.BlockSpec((TB, K), lambda i: (i, 0)),       # pipelined batch tiles of x
            pl.BlockSpec((_O_PAD, K), lambda i: (0, 0)),   # weight resident across grid
            pl.BlockSpec((_O_PAD, 1), lambda i: (0, 0)),   # bias resident across grid
        ],
        out_specs=pl.BlockSpec((_O_PAD, TB), lambda i: (0, i)),
        compiler_params=pltpu.CompilerParams(
            dimension_semantics=("parallel",),             # megacore split on v7x
            vmem_limit_bytes=vmem_limit),
        cost_estimate=cost,
    )(x2d, w_pad, b_pad)

    return out[:n_out].T                                   # (B, n_out) f32


if __name__ == "__main__":
    # Small shapes consistent with the module's forward.
    batch, n_channels, d_model, n_classes = 8, 4, 128, 2
    n_out = n_classes - 1

    key = jax.random.PRNGKey(0)
    kx, kw, kb = jax.random.split(key, 3)

    x = jax.random.normal(kx, (batch, n_channels, d_model), dtype=jnp.float32)

    # Deterministic parameter init (PyTorch nn.Linear-style uniform bounds).
    bound = 1.0 / (d_model ** 0.5)
    weight = jax.random.uniform(kw, (n_out, d_model), jnp.float32, -bound, bound)
    bias = jax.random.uniform(kb, (n_out,), jnp.float32, -bound, bound)

    # Parameter prep hoisted out of the forward (done once, as at module init).
    w_pad, b_pad = prepare_head_params(weight, bias, n_channels)

    y = classification_head(x, w_pad, b_pad, n_out)
    y = jax.block_until_ready(y)

    # Pure-JAX reference check (mean -> linear -> bias).
    ref = jnp.mean(x, axis=1) @ weight.T + bias
    assert y.shape == (batch, n_out)
    assert jnp.allclose(y, ref, atol=1e-4, rtol=1e-4), float(jnp.max(jnp.abs(y - ref)))

    # bf16 streaming path (halves HBM read bytes; f32 accumulation on the MXU).
    w16, b16 = prepare_head_params(weight, bias, n_channels, compute_dtype=jnp.bfloat16)
    y16 = jax.block_until_ready(
        classification_head(x.astype(jnp.bfloat16), w16, b16, n_out))
    assert jnp.allclose(y16, ref, atol=3e-2, rtol=3e-2), float(jnp.max(jnp.abs(y16 - ref)))

    print("KERNEL_OK")
</pallas_src>

<mosaic_0001>
module attributes {stable_mosaic.version = 11 : i64} {
  func.func @_head_kernel(%arg0: i32, %arg1: memref<8x512xf32, #tpu.memory_space<vmem>>, %arg2: memref<8x512xf32, #tpu.memory_space<vmem>>, %arg3: memref<8x1xf32, #tpu.memory_space<vmem>>, %arg4: memref<8x8xf32, #tpu.memory_space<vmem>>) attributes {dimension_semantics = [#tpu.dimension_semantics<parallel>], iteration_bounds = array<i64: 1>, scalar_prefetch = 0 : i64, scratch_operands = 0 : i64, tpu.core_type = #tpu.core_type<tc>, window_params = [{transform_indices = @transform_0, window_bounds = array<i64: 8, 512>}, {pipeline_mode = #tpu.pipeline_mode<synchronous>, transform_indices = @transform_1, window_bounds = array<i64: 8, 512>}, {pipeline_mode = #tpu.pipeline_mode<synchronous>, transform_indices = @transform_2, window_bounds = array<i64: 8, 1>}, {transform_indices = @transform_3, window_bounds = array<i64: 8, 8>}]} {
    %c0 = arith.constant 0 : index
    %c0_0 = arith.constant 0 : index
    %0 = vector.load %arg2[%c0, %c0_0] : memref<8x512xf32, #tpu.memory_space<vmem>>, vector<8x512xf32>
    %c0_1 = arith.constant 0 : index
    %c0_2 = arith.constant 0 : index
    %1 = vector.load %arg1[%c0_1, %c0_2] : memref<8x512xf32, #tpu.memory_space<vmem>>, vector<8x512xf32>
    %cst = arith.constant dense<0.000000e+00> : vector<8x8xf32>
    %2 = tpu.matmul %0, %1, %cst {dimension_numbers = #tpu.dot_dimension_numbers<[1], [1], [0], [0], [0, 0, 1, 0], [], []>} : vector<8x512xf32>, vector<8x512xf32>, vector<8x8xf32> -> vector<8x8xf32>
    %c0_3 = arith.constant 0 : index
    %c0_4 = arith.constant 0 : index
    %3 = vector.load %arg3[%c0_3, %c0_4] : memref<8x1xf32, #tpu.memory_space<vmem>>, vector<8x1xf32>
    %4 = vector.broadcast %3 : vector<8x1xf32> to vector<8x8xf32>
    %5 = arith.addf %2, %4 : vector<8x8xf32>
    %c0_5 = arith.constant 0 : index
    %c0_6 = arith.constant 0 : index
    %6 = vector.load %arg4[%c0_5, %c0_6] : memref<8x8xf32, #tpu.memory_space<vmem>>, vector<8x8xf32>
    tpu.vector_store %arg4[%c0_5, %c0_6], %5 {strides = array<i32>} : memref<8x8xf32, #tpu.memory_space<vmem>>, vector<8x8xf32>,
    return
  }
  func.func @transform_0(%arg0: i32) -> (i32, i32) {
    %c0_i32 = arith.constant 0 : i32
    %c0_i32_0 = arith.constant 0 : i32
    return %arg0, %c0_i32 : i32, i32
  }
  func.func @transform_1(%arg0: i32) -> (i32, i32) {
    %c0_i32 = arith.constant 0 : i32
    %c0_i32_0 = arith.constant 0 : i32
    %c0_i32_1 = arith.constant 0 : i32
    return %c0_i32, %c0_i32_0 : i32, i32
  }
  func.func @transform_2(%arg0: i32) -> (i32, i32) {
    %c0_i32 = arith.constant 0 : i32
    %c0_i32_0 = arith.constant 0 : i32
    %c0_i32_1 = arith.constant 0 : i32
    return %c0_i32, %c0_i32_0 : i32, i32
  }
  func.func @transform_3(%arg0: i32) -> (i32, i32) {
    %c0_i32 = arith.constant 0 : i32
    %c0_i32_0 = arith.constant 0 : i32
    return %c0_i32, %arg0 : i32, i32
  }
}

</mosaic_0001>

<llo_original>
// kernel: tpu_custom_call.1
$region0: #{tpu_custom_call.1}
  #allocation0 [shape = 'u32[]', space=smem, size = 0x4, offset = 0x4, fixed_abs, tag = 'smem constant byte address 0x4 - core index']
  #allocation1 [shape = 'u32[144,128]{1,0:T(1,128)}', space=vmem, size = 0x12000, scoped, tag = 'internal scratch']
  %s0 = inlined_call_operand.hbm [shape: f32[8,512], index: 0, kind: input, shape index: {}]
  %s1 = inlined_call_operand.hbm [shape: f32[8,512], index: 1, kind: input, shape index: {}]
  %s2 = inlined_call_operand.vmem [shape: f32[8,1], index: 2, kind: input, shape index: {}]
  %s3 = inlined_call_operand.hbm [shape: f32[8,8], index: 3, kind: output, shape index: {}]
  %s4 = sld [smem:[#allocation0]]
  $region30: #{tpu_custom_call.1} parent=0
    _
  %s6 = ssub.s32 1, %s4
  %s7 = scalar_select 0, %s6, %s4
  $region1: #{tpu_custom_call.1} parent=0
    #allocation2 [shape = 'u8[16384]{0}', space=vmem, size = 0x4000, scoped, tag = 'input window, operand 0, single buffered']
    #allocation3 [shape = 's32[1]{0}', space=sflag, size = 0x4, scoped, tag = 'scoped memory for tpu_custom_call.1']
    #allocation4 [shape = 's32[1]{0}', space=sflag, size = 0x4, scoped, tag = 'scoped memory for tpu_custom_call.1']
    #allocation5 [shape = 'u8[16384]{0}', space=vmem, size = 0x4000, scoped, tag = 'input window, operand 1, single buffered']
    #allocation6 [shape = 's32[1]{0}', space=sflag, size = 0x4, scoped, tag = 'scoped memory for tpu_custom_call.1']
    #allocation7 [shape = 'u8[4096]{0}', space=vmem, size = 0x1000, scoped, tag = 'output window, operand 0, single buffered']
    %8 = vsyncpa [#allocation3], 0
    %9 = vsyncpa [#allocation6], 0
    %10 = vsyncpa [#allocation4], 0
    // Predicated region
    $region2: #{tpu_custom_call.1} parent=1 // pred_check
      _
    $region3: #{tpu_custom_call.1} parent=1 // pred_check_branch
      %12 = sbr.rel (0) target = $region5
    $region4: #{tpu_custom_call.1} parent=1 // pred_region
      %s14 = ssub.s32 512, 512
      %15 = vsyncadd [#allocation3], %s14
      %s17 = sshll.u32 [#allocation2], 4
      %s18 = int_to_ptr.vmem [resolvable:$true] %s17
      %20 = dma.hbm_to_vmem [thread:$0]  %s0, 512, %s18, [#allocation3]
    $region5: #{tpu_custom_call.1} parent=1 // pred_fallthru
      _
    // Predicated region
    $region6: #{tpu_custom_call.1} parent=1 // pred_check
      _
    $region7: #{tpu_custom_call.1} parent=1 // pred_check_branch
      %22 = sbr.rel (0) target = $region9
    $region8: #{tpu_custom_call.1} parent=1 // pred_region
      %s24 = ssub.s32 512, 512
      %25 = vsyncadd [#allocation6], %s24
      %s27 = sshll.u32 [#allocation5], 4
      %s28 = int_to_ptr.vmem [resolvable:$true] %s27
      %30 = dma.hbm_to_vmem [thread:$0]  %s1, 512, %s28, [#allocation6]
    $region9: #{tpu_custom_call.1} parent=1 // pred_fallthru
      _
    // Predicated region
    $region10: #{tpu_custom_call.1} parent=1 // pred_check
      _
    $region11: #{tpu_custom_call.1} parent=1 // pred_check_branch
      %32 = sbr.rel (0) target = $region13
    $region12: #{tpu_custom_call.1} parent=1 // pred_region
      _
    $region13: #{tpu_custom_call.1} parent=1 // pred_fallthru
      _
    // Predicated region
    $region14: #{tpu_custom_call.1} parent=1 // pred_check
      _
    $region15: #{tpu_custom_call.1} parent=1 // pred_check_branch
      %34 = sbr.rel (0) target = $region17
    $region16: #{tpu_custom_call.1} parent=1 // pred_region
      %35 = dma.done [#allocation3], 512
    $region17: #{tpu_custom_call.1} parent=1 // pred_fallthru
      _
    // Predicated region
    $region18: #{tpu_custom_call.1} parent=1 // pred_check
      _
    $region19: #{tpu_custom_call.1} parent=1 // pred_check_branch
      %37 = sbr.rel (0) target = $region21
    $region20: #{tpu_custom_call.1} parent=1 // pred_region
      %38 = dma.done [#allocation6], 512
    $region21: #{tpu_custom_call.1} parent=1 // pred_fallthru
      _
    %v39 = vld [vmem:[#allocation5] sm:$0xff]
    %v40 = vld [vmem:[#allocation5 + $0x8] sm:$0xff]
    %v41 = vld [vmem:[#allocation5 + $0x10] sm:$0xff]
    %v42 = vld [vmem:[#allocation5 + $0x18] sm:$0xff]
    %v43 = vld [vmem:[#allocation2] sm:$0xff]
    %v44 = vld [vmem:[#allocation2 + $0x8] sm:$0xff]
    %v45 = vld [vmem:[#allocation2 + $0x10] sm:$0xff]
    %v46 = vld [vmem:[#allocation2 + $0x18] sm:$0xff]
    %v47 = vld [vmem:[%s2] sm:$0xff]
    %49 = vset.pattern.permute.xlu0 0
    %50 = vperm.xlu0 %49, %v47
    %v51 = vpop.permute.xlu0 %50
    %53 = vmatprep.subr.mxu0 %v44
    %54 = vmatpush1.xpose.msra.mxu0 %v43
    %55 = vmatprep.subr.mxu0 0.0
    %56 = vmatpush1.xpose.msra.mxu0 0.0
    %57 = vmatprep.subr.mxu0 0.0
    %58 = vmatpush1.xpose.msra.mxu0 0.0
    %59 = vmatprep.subr.mxu0 0.0
    %60 = vmatpush1.xpose.msra.mxu0 0.0
    %61 = vmatprep.subr.mxu0 0.0
    %62 = vmatpush1.xpose.msra.mxu0 0.0
    %63 = vmatprep.subr.mxu0 0.0
    %64 = vmatpush1.xpose.msra.mxu0 0.0
    %65 = vmatprep.subr.mxu0 0.0
    %66 = vmatpush1.xpose.msra.mxu0 0.0
    %67 = vmatprep.subr.mxu0 0.0
    %68 = vmatpush1.xpose.msra.mxu0 0.0
    %69 = vmatprep.subr.mxu0 0.0
    %70 = vmatpush1.xpose.msra.mxu0 0.0
    %71 = vmatprep.subr.mxu0 0.0
    %72 = vmatpush1.xpose.msra.mxu0 0.0
    %73 = vmatprep.subr.mxu0 0.0
    %74 = vmatpush1.xpose.msra.mxu0 0.0
    %75 = vmatprep.subr.mxu0 0.0
    %76 = vmatpush1.xpose.msra.mxu0 0.0
    %77 = vmatprep.subr.mxu0 0.0
    %78 = vmatpush1.xpose.msra.mxu0 0.0
    %79 = vmatprep.subr.mxu0 0.0
    %80 = vmatpush1.xpose.msra.mxu0 0.0
    %81 = vmatprep.subr.mxu0 0.0
    %82 = vmatpush1.xpose.msra.mxu0 0.0
    %83 = vmatprep.subr.mxu0 0.0
    %84 = vmatpush1.xpose.msra.mxu0 0.0
    %85 = vmatprep.subr.mxu0 0.0
    %86 = vmatpush1.xpose.msra.mxu0 0.0
    %87 = vmatprep.subr.mxu0 0.0
    %88 = vmatpush1.xpose.msra.mxu0 0.0
    %89 = vmatprep.subr.mxu0 0.0
    %90 = vmatpush1.xpose.msra.mxu0 0.0
    %91 = vmatprep.subr.mxu0 0.0
    %92 = vmatpush1.xpose.msra.mxu0 0.0
    %93 = vmatprep.subr.mxu0 0.0
    %94 = vmatpush1.xpose.msra.mxu0 0.0
    %95 = vmatprep.subr.mxu0 0.0
    %96 = vmatpush1.xpose.msra.mxu0 0.0
    %97 = vmatprep.subr.mxu0 0.0
    %98 = vmatpush1.xpose.msra.mxu0 0.0
    %99 = vmatprep.subr.mxu0 0.0
    %100 = vmatpush1.xpose.msra.mxu0 0.0
    %101 = vmatprep.subr.mxu0 0.0
    %102 = vmatpush1.xpose.msra.mxu0 0.0
    %103 = vmatprep.subr.mxu0 0.0
    %104 = vmatpush1.xpose.msra.mxu0 0.0
    %105 = vmatprep.subr.mxu0 0.0
    %106 = vmatpush1.xpose.msra.mxu0 0.0
    %107 = vmatprep.subr.mxu0 0.0
    %108 = vmatpush1.xpose.msra.mxu0 0.0
    %109 = vmatprep.subr.mxu0 0.0
    %110 = vmatpush1.xpose.msra.mxu0 0.0
    %111 = vmatprep.subr.mxu0 0.0
    %112 = vmatpush1.xpose.msra.mxu0 0.0
    %113 = vmatprep.subr.mxu0 0.0
    %114 = vmatpush1.xpose.msra.mxu0 0.0
    %115 = vmatprep.subr.mxu0 0.0
    %116 = vmatpush1.xpose.msra.mxu0 0.0
    %117 = vmatprep.mubr.f32.mxu0 %v40
    %118 = vmatmul.mubr.f32.gmra.mrb[0].mxu0 %v39
    %v119 = vpop.f32.mrb[0].mxu0
    %v120 = vadd.f32 %v51, %v119
    %v121 = vpop.f32.mrb[0].mxu0
    %122 = vdwg.mxu0
    %123 = vmatprep.subr.mxu0 %v46
    %124 = vmatpush1.xpose.msra.mxu0 %v45
    %125 = vmatprep.subr.mxu0 0.0
    %126 = vmatpush1.xpose.msra.mxu0 0.0
    %127 = vmatprep.subr.mxu0 0.0
    %128 = vmatpush1.xpose.msra.mxu0 0.0
    %129 = vmatprep.subr.mxu0 0.0
    %130 = vmatpush1.xpose.msra.mxu0 0.0
    %131 = vmatprep.subr.mxu0 0.0
    %132 = vmatpush1.xpose.msra.mxu0 0.0
    %133 = vmatprep.subr.mxu0 0.0
    %134 = vmatpush1.xpose.msra.mxu0 0.0
    %135 = vmatprep.subr.mxu0 0.0
    %136 = vmatpush1.xpose.msra.mxu0 0.0
    %137 = vmatprep.subr.mxu0 0.0
    %138 = vmatpush1.xpose.msra.mxu0 0.0
    %139 = vmatprep.subr.mxu0 0.0
    %140 = vmatpush1.xpose.msra.mxu0 0.0
    %141 = vmatprep.subr.mxu0 0.0
    %142 = vmatpush1.xpose.msra.mxu0 0.0
    %143 = vmatprep.subr.mxu0 0.0
    %144 = vmatpush1.xpose.msra.mxu0 0.0
    %145 = vmatprep.subr.mxu0 0.0
    %146 = vmatpush1.xpose.msra.mxu0 0.0
    %147 = vmatprep.subr.mxu0 0.0
    %148 = vmatpush1.xpose.msra.mxu0 0.0
    %149 = vmatprep.subr.mxu0 0.0
    %150 = vmatpush1.xpose.msra.mxu0 0.0
    %151 = vmatprep.subr.mxu0 0.0
    %152 = vmatpush1.xpose.msra.mxu0 0.0
    %153 = vmatprep.subr.mxu0 0.0
    %154 = vmatpush1.xpose.msra.mxu0 0.0
    %155 = vmatprep.subr.mxu0 0.0
    %156 = vmatpush1.xpose.msra.mxu0 0.0
    %157 = vmatprep.subr.mxu0 0.0
    %158 = vmatpush1.xpose.msra.mxu0 0.0
    %159 = vmatprep.subr.mxu0 0.0
    %160 = vmatpush1.xpose.msra.mxu0 0.0
    %161 = vmatprep.subr.mxu0 0.0
    %162 = vmatpush1.xpose.msra.mxu0 0.0
    %163 = vmatprep.subr.mxu0 0.0
    %164 = vmatpush1.xpose.msra.mxu0 0.0
    %165 = vmatprep.subr.mxu0 0.0
    %166 = vmatpush1.xpose.msra.mxu0 0.0
    %167 = vmatprep.subr.mxu0 0.0
    %168 = vmatpush1.xpose.msra.mxu0 0.0
    %169 = vmatprep.subr.mxu0 0.0
    %170 = vmatpush1.xpose.msra.mxu0 0.0
    %171 = vmatprep.subr.mxu0 0.0
    %172 = vmatpush1.xpose.msra.mxu0 0.0
    %173 = vmatprep.subr.mxu0 0.0
    %174 = vmatpush1.xpose.msra.mxu0 0.0
    %175 = vmatprep.subr.mxu0 0.0
    %176 = vmatpush1.xpose.msra.mxu0 0.0
    %177 = vmatprep.subr.mxu0 0.0
    %178 = vmatpush1.xpose.msra.mxu0 0.0
    %179 = vmatprep.subr.mxu0 0.0
    %180 = vmatpush1.xpose.msra.mxu0 0.0
    %181 = vmatprep.subr.mxu0 0.0
    %182 = vmatpush1.xpose.msra.mxu0 0.0
    %183 = vmatprep.subr.mxu0 0.0
    %184 = vmatpush1.xpose.msra.mxu0 0.0
    %185 = vmatprep.subr.mxu0 0.0
    %186 = vmatpush1.xpose.msra.mxu0 0.0
    %187 = vmatprep.mubr.f32.mxu0 %v42
    %188 = vmatmul.mubr.f32.gmra.mrb[0].mxu0 %v41
    %v189 = vpop.f32.mrb[0].mxu0
    %v190 = vadd.f32 %v120, %v189
    %v191 = vpop.f32.mrb[0].mxu0
    %192 = vdwg.mxu0
    %vm193 = vcmask 64512
    %194 = vst.msk [vmem:[#allocation7] sm:$0xff] %vm193, %v190
    // Predicated region
    $region22: #{tpu_custom_call.1} parent=1 // pred_check
      _
    $region23: #{tpu_custom_call.1} parent=1 // pred_check_branch
      %196 = sbr.rel (0) target = $region25
    $region24: #{tpu_custom_call.1} parent=1 // pred_region
      %s198 = ssub.s32 128, 128
      %199 = vsyncadd [#allocation4], %s198
      %s201 = sshll.u32 [#allocation7], 4
      %s202 = int_to_ptr.vmem [resolvable:$true] %s201
      %204 = dma.vmem_to_hbm [thread:$0]  %s202, 128, %s3, [#allocation4]
    $region25: #{tpu_custom_call.1} parent=1 // pred_fallthru
      _
    // Predicated region
    $region26: #{tpu_custom_call.1} parent=1 // pred_check
      _
    $region27: #{tpu_custom_call.1} parent=1 // pred_check_branch
      %206 = sbr.rel (0) target = $region29
    $region28: #{tpu_custom_call.1} parent=1 // pred_region
      %207 = dma.done [#allocation4], 128
    $region29: #{tpu_custom_call.1} parent=1 // pred_fallthru
      _
    %208 = vsyncpa [#allocation3], 1
    %209 = vsyncpa [#allocation6], 1
    %210 = vsyncpa [#allocation4], 1

</llo_original>
